<compile_context>
chip_gen: v5e
topology: v5e:2x2
jax: 0.10.0
libtpu: 0.0.40
codegen_flags: <defaults>
</compile_context>

<pallas_src>
import jax
import jax.numpy as jnp
from jax.experimental import pallas as pl
from jax.experimental.pallas import tpu as pltpu

LANE = 128          # TPU lane width; hidden/output dims (10/20/10/8) pad to this.
BATCH_BLOCK = 256   # M-block for the batched grid path (multiple of 256 rows).
GRID_THRESHOLD = 256  # below this, a single whole-array call is launch-bound anyway.


def mlp_kernel(x_ref, w1_ref, ws_ref, bs_ref, o_ref):
    """x [M,feat] f32, w1 [feat,128], ws [3,128,128] (W2,W3,W4), bs [4,1,128]."""
    h = jnp.dot(x_ref[...], w1_ref[...], preferred_element_type=jnp.float32) + bs_ref[0]
    h = jnp.maximum(h, 0.0)                                            # relu(fc1(x))

    h = jnp.dot(h, ws_ref[0], preferred_element_type=jnp.float32) + bs_ref[1]
    h = jnp.maximum(h, 0.0)                                            # relu(fc2(x))

    h = jnp.dot(h, ws_ref[1], preferred_element_type=jnp.float32) + bs_ref[2]
    h = jnp.maximum(h, 0.0)                                            # relu(fc3(x))

    # fc4(relu(h)) == fc4(h): h >= 0 after the previous ReLU.
    o_ref[...] = jnp.dot(h, ws_ref[2], preferred_element_type=jnp.float32) + bs_ref[3]


def pack_params(params):
    """One-time (out of the forward path) packing of torch-layout params
    (W [out,in], b [out]) into 3 kernel-ready, lane-dense slabs:
      W1 -> [in, 128]  (transposed, zero-padded)
      Ws -> [3, 128, 128]  stack of transposed/zero-padded W2, W3, W4
      bs -> [4, 1, 128]    stack of zero-padded b1..b4
    Padded entries are exactly 0, so padded lanes stay 0 through bias+ReLU."""
    W1, b1 = params["fc1"]
    h1, in_f = W1.shape
    w1p = jnp.zeros((in_f, LANE), jnp.float32).at[:, :h1].set(W1.T)

    ws = jnp.zeros((3, LANE, LANE), jnp.float32)
    bs = jnp.zeros((4, 1, LANE), jnp.float32).at[0, 0, :h1].set(b1)
    for i, name in enumerate(("fc2", "fc3", "fc4")):
        W, b = params[name]
        out_f, inn = W.shape
        ws = ws.at[i, :inn, :out_f].set(W.T)
        bs = bs.at[i + 1, 0, :out_f].set(b)
    return (w1p, ws, bs)


@jax.jit
def very_simple_model_forward(x_nchw, packed):
    """x_nchw: [B, C, H, W] float32. Returns the lane-padded [B, 128] output;
    slice [:, :output_size] at the consumer (kept out of the hot path)."""
    w1p, ws, bs = packed
    B = x_nchw.shape[0]
    feat = x_nchw.shape[1] * x_nchw.shape[-2] * x_nchw.shape[-1]
    x2d = x_nchw.reshape(B, feat)  # same semantics as torch .view(-1, C*H*W)

    param_bytes = 4 * (w1p.size + ws.size + bs.size)

    if B < GRID_THRESHOLD:
        # Launch-latency-bound regime: one whole-array invocation, 4 operands.
        flops = 2 * B * (feat * LANE + 3 * LANE * LANE)  # padded, as executed
        cost = pl.CostEstimate(
            flops=flops, transcendentals=0,
            bytes_accessed=4 * (x2d.size + B * LANE) + param_bytes)
        return pl.pallas_call(
            mlp_kernel,
            out_shape=jax.ShapeDtypeStruct((B, LANE), jnp.float32),
            in_specs=[pl.BlockSpec(memory_space=pltpu.VMEM)] * 4,
            out_specs=pl.BlockSpec(memory_space=pltpu.VMEM),
            cost_estimate=cost,
        )(x2d, w1p, ws, bs)

    # Batched path: 1-D parallel grid over 256-row batch blocks, weights resident.
    bm = BATCH_BLOCK
    b_pad = pl.cdiv(B, bm) * bm
    if b_pad != B:
        x2d = jnp.pad(x2d, ((0, b_pad - B), (0, 0)))
    flops = 2 * b_pad * (feat * LANE + 3 * LANE * LANE)
    cost = pl.CostEstimate(
        flops=flops, transcendentals=0,
        bytes_accessed=4 * (b_pad * feat + b_pad * LANE) + param_bytes)
    out = pl.pallas_call(
        mlp_kernel,
        out_shape=jax.ShapeDtypeStruct((b_pad, LANE), jnp.float32),
        grid_spec=pltpu.PrefetchScalarGridSpec(
            num_scalar_prefetch=0,
            grid=(b_pad // bm,),
            in_specs=[
                pl.BlockSpec((bm, feat), lambda i: (i, 0)),          # x block
                pl.BlockSpec((feat, LANE), lambda i: (0, 0)),        # W1 resident
                pl.BlockSpec((3, LANE, LANE), lambda i: (0, 0, 0)),  # W2..W4 resident
                pl.BlockSpec((4, 1, LANE), lambda i: (0, 0, 0)),     # biases resident
            ],
            out_specs=pl.BlockSpec((bm, LANE), lambda i: (i, 0)),
        ),
        compiler_params=pltpu.CompilerParams(dimension_semantics=("parallel",)),
        cost_estimate=cost,
    )(x2d, w1p, ws, bs)
    return out[:B] if b_pad != B else out


def init_params(key, input_size, output_size, gain=1.0):
    """Deterministic init mirroring the torch module's __init__ shapes/ranges."""
    h1, h2, h3 = 10, 20, 10
    dims = [(input_size, h1), (h1, h2), (h2, h3), (h3, output_size)]
    names = ("fc1", "fc2", "fc3", "fc4")
    params = {}
    for name, (fan_in, fan_out) in zip(names, dims):
        key, kw, kb = jax.random.split(key, 3)
        w_bound = gain * (6.0 / fan_in) ** 0.5            # custom uniform_ init on weights
        W = jax.random.uniform(kw, (fan_out, fan_in), jnp.float32, -w_bound, w_bound)
        b_bound = 1.0 / (fan_in ** 0.5)                   # torch Linear default bias init
        b = jax.random.uniform(kb, (fan_out,), jnp.float32, -b_bound, b_bound)
        params[name] = (W, b)
    return params


if __name__ == "__main__":
    key = jax.random.PRNGKey(0)
    k_x, k_p, k_xb = jax.random.split(key, 3)

    B, C, H, W = 2, 4, 16, 16
    input_size = C * H * W     # 1024
    output_size = 8

    x = jax.random.normal(k_x, (B, C, H, W), dtype=jnp.float32)
    params = init_params(k_p, input_size, output_size, gain=1.0)
    packed = pack_params(params)   # one-time layout work, hoisted out of forward

    # Reference in plain JAX against the original (unpadded) params.
    def ref(x_nchw, p):
        h = x_nchw.reshape(x_nchw.shape[0], -1)
        for name in ("fc1", "fc2", "fc3"):
            Wm, b = p[name]
            h = jnp.maximum(h @ Wm.T + b, 0.0)
        Wm, b = p["fc4"]
        return jnp.maximum(h, 0.0) @ Wm.T + b

    # Small-batch (launch-bound) path.
    out_padded = very_simple_model_forward(x, packed)
    jax.block_until_ready(out_padded)
    out = out_padded[:, :output_size]          # slice at the consumer, not in the kernel path
    assert out.shape == (B, output_size)
    assert jnp.allclose(out, ref(x, params), atol=2e-4, rtol=2e-4)

    # Batched path sanity check (exercises the 1-D parallel grid over B).
    Bb = 512
    xb = jax.random.normal(k_xb, (Bb, C, H, W), dtype=jnp.float32)
    outb_padded = very_simple_model_forward(xb, packed)
    jax.block_until_ready(outb_padded)
    assert outb_padded.shape == (Bb, LANE)
    assert jnp.allclose(outb_padded[:, :output_size], ref(xb, params), atol=2e-4, rtol=2e-4)

    print("KERNEL_OK")
</pallas_src>

<mosaic_0001>
module attributes {stable_mosaic.version = 11 : i64} {
  func.func @mlp_kernel(%arg0: memref<2x1024xf32, #tpu.memory_space<vmem>>, %arg1: memref<1024x128xf32, #tpu.memory_space<vmem>>, %arg2: memref<3x128x128xf32, #tpu.memory_space<vmem>>, %arg3: memref<4x1x128xf32, #tpu.memory_space<vmem>>, %arg4: memref<2x128xf32, #tpu.memory_space<vmem>>) attributes {dimension_semantics = [], scalar_prefetch = 0 : i64, scratch_operands = 0 : i64, tpu.core_type = #tpu.core_type<tc>} {
    %c0 = arith.constant 0 : index
    %c0_0 = arith.constant 0 : index
    %0 = vector.load %arg0[%c0, %c0_0] : memref<2x1024xf32, #tpu.memory_space<vmem>>, vector<2x1024xf32>
    %c0_1 = arith.constant 0 : index
    %c0_2 = arith.constant 0 : index
    %1 = vector.load %arg1[%c0_1, %c0_2] : memref<1024x128xf32, #tpu.memory_space<vmem>>, vector<1024x128xf32>
    %cst = arith.constant dense<0.000000e+00> : vector<2x128xf32>
    %2 = tpu.matmul %0, %1, %cst {dimension_numbers = #tpu.dot_dimension_numbers<[1], [0], [0], [1], [0, 0, 1, 1], [], []>} : vector<2x1024xf32>, vector<1024x128xf32>, vector<2x128xf32> -> vector<2x128xf32>
    %c0_3 = arith.constant 0 : index
    %c0_4 = arith.constant 0 : index
    %c0_5 = arith.constant 0 : index
    %3 = vector.load %arg3[%c0_3, %c0_4, %c0_5] : memref<4x1x128xf32, #tpu.memory_space<vmem>>, vector<1x1x128xf32>
    %4 = vector.shape_cast %3 : vector<1x1x128xf32> to vector<1x128xf32>
    %5 = vector.broadcast %4 : vector<1x128xf32> to vector<2x128xf32>
    %6 = arith.addf %2, %5 : vector<2x128xf32>
    %cst_6 = arith.constant 0.000000e+00 : f32
    %7 = vector.broadcast %cst_6 : f32 to vector<2x128xf32>
    %8 = arith.maximumf %6, %7 : vector<2x128xf32>
    %c0_7 = arith.constant 0 : index
    %c0_8 = arith.constant 0 : index
    %c0_9 = arith.constant 0 : index
    %9 = vector.load %arg2[%c0_7, %c0_8, %c0_9] : memref<3x128x128xf32, #tpu.memory_space<vmem>>, vector<1x128x128xf32>
    %10 = vector.shape_cast %9 : vector<1x128x128xf32> to vector<128x128xf32>
    %cst_10 = arith.constant dense<0.000000e+00> : vector<2x128xf32>
    %11 = tpu.matmul %8, %10, %cst_10 {dimension_numbers = #tpu.dot_dimension_numbers<[1], [0], [0], [1], [0, 0, 1, 1], [], []>} : vector<2x128xf32>, vector<128x128xf32>, vector<2x128xf32> -> vector<2x128xf32>
    %c1 = arith.constant 1 : index
    %c0_11 = arith.constant 0 : index
    %c0_12 = arith.constant 0 : index
    %12 = vector.load %arg3[%c1, %c0_11, %c0_12] : memref<4x1x128xf32, #tpu.memory_space<vmem>>, vector<1x1x128xf32>
    %13 = vector.shape_cast %12 : vector<1x1x128xf32> to vector<1x128xf32>
    %14 = vector.broadcast %13 : vector<1x128xf32> to vector<2x128xf32>
    %15 = arith.addf %11, %14 : vector<2x128xf32>
    %cst_13 = arith.constant 0.000000e+00 : f32
    %16 = vector.broadcast %cst_13 : f32 to vector<2x128xf32>
    %17 = arith.maximumf %15, %16 : vector<2x128xf32>
    %c1_14 = arith.constant 1 : index
    %c0_15 = arith.constant 0 : index
    %c0_16 = arith.constant 0 : index
    %18 = vector.load %arg2[%c1_14, %c0_15, %c0_16] : memref<3x128x128xf32, #tpu.memory_space<vmem>>, vector<1x128x128xf32>
    %19 = vector.shape_cast %18 : vector<1x128x128xf32> to vector<128x128xf32>
    %cst_17 = arith.constant dense<0.000000e+00> : vector<2x128xf32>
    %20 = tpu.matmul %17, %19, %cst_17 {dimension_numbers = #tpu.dot_dimension_numbers<[1], [0], [0], [1], [0, 0, 1, 1], [], []>} : vector<2x128xf32>, vector<128x128xf32>, vector<2x128xf32> -> vector<2x128xf32>
    %c2 = arith.constant 2 : index
    %c0_18 = arith.constant 0 : index
    %c0_19 = arith.constant 0 : index
    %21 = vector.load %arg3[%c2, %c0_18, %c0_19] : memref<4x1x128xf32, #tpu.memory_space<vmem>>, vector<1x1x128xf32>
    %22 = vector.shape_cast %21 : vector<1x1x128xf32> to vector<1x128xf32>
    %23 = vector.broadcast %22 : vector<1x128xf32> to vector<2x128xf32>
    %24 = arith.addf %20, %23 : vector<2x128xf32>
    %cst_20 = arith.constant 0.000000e+00 : f32
    %25 = vector.broadcast %cst_20 : f32 to vector<2x128xf32>
    %26 = arith.maximumf %24, %25 : vector<2x128xf32>
    %c2_21 = arith.constant 2 : index
    %c0_22 = arith.constant 0 : index
    %c0_23 = arith.constant 0 : index
    %27 = vector.load %arg2[%c2_21, %c0_22, %c0_23] : memref<3x128x128xf32, #tpu.memory_space<vmem>>, vector<1x128x128xf32>
    %28 = vector.shape_cast %27 : vector<1x128x128xf32> to vector<128x128xf32>
    %cst_24 = arith.constant dense<0.000000e+00> : vector<2x128xf32>
    %29 = tpu.matmul %26, %28, %cst_24 {dimension_numbers = #tpu.dot_dimension_numbers<[1], [0], [0], [1], [0, 0, 1, 1], [], []>} : vector<2x128xf32>, vector<128x128xf32>, vector<2x128xf32> -> vector<2x128xf32>
    %c3 = arith.constant 3 : index
    %c0_25 = arith.constant 0 : index
    %c0_26 = arith.constant 0 : index
    %30 = vector.load %arg3[%c3, %c0_25, %c0_26] : memref<4x1x128xf32, #tpu.memory_space<vmem>>, vector<1x1x128xf32>
    %31 = vector.shape_cast %30 : vector<1x1x128xf32> to vector<1x128xf32>
    %32 = vector.broadcast %31 : vector<1x128xf32> to vector<2x128xf32>
    %33 = arith.addf %29, %32 : vector<2x128xf32>
    %c0_27 = arith.constant 0 : index
    %c0_28 = arith.constant 0 : index
    %34 = vector.load %arg4[%c0_27, %c0_28] : memref<2x128xf32, #tpu.memory_space<vmem>>, vector<2x128xf32>
    tpu.vector_store %arg4[%c0_27, %c0_28], %33 {strides = array<i32>} : memref<2x128xf32, #tpu.memory_space<vmem>>, vector<2x128xf32>,
    return
  }
}

</mosaic_0001>

<llo_original>
// kernel: very_simple_model_forward.1
$region0: #{very_simple_model_forward.1}
  #allocation0 [shape = 'u32[]', space=smem, size = 0x4, offset = 0x4, fixed_abs, tag = 'smem constant byte address 0x4 - core index']
  #allocation1 [shape = 'u32[72,128]{1,0:T(1,128)}', space=vmem, size = 0x9000, scoped, tag = 'internal scratch']
  %s0 = inlined_call_operand.vmem [shape: f32[2,1024], index: 0, kind: input, shape index: {}]
  %s1 = inlined_call_operand.hbm [shape: f32[1024,128], index: 1, kind: input, shape index: {}]
  %s2 = inlined_call_operand.hbm [shape: f32[3,128,128], index: 2, kind: input, shape index: {}]
  %s3 = inlined_call_operand.vmem [shape: f32[4,1,128], index: 3, kind: input, shape index: {}]
  %s4 = inlined_call_operand.hbm [shape: f32[2,128], index: 4, kind: output, shape index: {}]
  %s5 = sld [smem:[#allocation0]]
  $region34: #{very_simple_model_forward.1} parent=0
    _
  %s7 = ssub.s32 1, %s5
  %s8 = scalar_select 0, %s7, %s5
  $region1: #{very_simple_model_forward.1} parent=0
    #allocation2 [shape = 'u8[524288]{0}', space=vmem, size = 0x80000, scoped, tag = 'input window, operand 1, single buffered']
    #allocation3 [shape = 's32[1]{0}', space=sflag, size = 0x4, scoped, tag = 'scoped memory for very_simple_model_forward.1']
    #allocation4 [shape = 's32[1]{0}', space=sflag, size = 0x4, scoped, tag = 'scoped memory for very_simple_model_forward.1']
    #allocation5 [shape = 'u8[196608]{0}', space=vmem, size = 0x30000, scoped, tag = 'input window, operand 2, single buffered']
    #allocation6 [shape = 's32[1]{0}', space=sflag, size = 0x4, scoped, tag = 'scoped memory for very_simple_model_forward.1']
    #allocation7 [shape = 'u8[1024]{0}', space=vmem, size = 0x400, scoped, tag = 'output window, operand 0, single buffered']
    %9 = vsyncpa [#allocation3], 0
    %10 = vsyncpa [#allocation6], 0
    %11 = vsyncpa [#allocation4], 0
    // Predicated region
    $region2: #{very_simple_model_forward.1} parent=1 // pred_check
      _
    $region3: #{very_simple_model_forward.1} parent=1 // pred_check_branch
      %13 = sbr.rel (0) target = $region5
    $region4: #{very_simple_model_forward.1} parent=1 // pred_region
      _
    $region5: #{very_simple_model_forward.1} parent=1 // pred_fallthru
      _
    // Predicated region
    $region6: #{very_simple_model_forward.1} parent=1 // pred_check
      _
    $region7: #{very_simple_model_forward.1} parent=1 // pred_check_branch
      %15 = sbr.rel (0) target = $region9
    $region8: #{very_simple_model_forward.1} parent=1 // pred_region
      %17 = vsyncadd [#allocation3], 0
      %s18 = sshll.u32 %s1, 4
      %s19 = int_to_ptr.hbm [resolvable:$true] %s18
      %s20 = sshll.u32 [#allocation2], 4
      %s21 = int_to_ptr.vmem [resolvable:$true] %s20
      %26 = dma.hbm_to_vmem [thread:$0]  %s19, 16384, %s21, [#allocation3], 128, 128, 8
    $region9: #{very_simple_model_forward.1} parent=1 // pred_fallthru
      _
    // Predicated region
    $region10: #{very_simple_model_forward.1} parent=1 // pred_check
      _
    $region11: #{very_simple_model_forward.1} parent=1 // pred_check_branch
      %28 = sbr.rel (0) target = $region13
    $region12: #{very_simple_model_forward.1} parent=1 // pred_region
      %30 = vsyncadd [#allocation6], 0
      %s31 = sshll.u32 %s2, 4
      %s32 = int_to_ptr.hbm [resolvable:$true] %s31
      %s33 = sshll.u32 [#allocation5], 4
      %s34 = int_to_ptr.vmem [resolvable:$true] %s33
      %39 = dma.hbm_to_vmem [thread:$0]  %s32, 6144, %s34, [#allocation6], 128, 128, 8
    $region13: #{very_simple_model_forward.1} parent=1 // pred_fallthru
      _
    // Predicated region
    $region14: #{very_simple_model_forward.1} parent=1 // pred_check
      _
    $region15: #{very_simple_model_forward.1} parent=1 // pred_check_branch
      %41 = sbr.rel (0) target = $region17
    $region16: #{very_simple_model_forward.1} parent=1 // pred_region
      _
    $region17: #{very_simple_model_forward.1} parent=1 // pred_fallthru
      _
    // Predicated region
    $region18: #{very_simple_model_forward.1} parent=1 // pred_check
      _
    $region19: #{very_simple_model_forward.1} parent=1 // pred_check_branch
      %43 = sbr.rel (0) target = $region21
    $region20: #{very_simple_model_forward.1} parent=1 // pred_region
      %45 = dma.done [#allocation3], 16384
    $region21: #{very_simple_model_forward.1} parent=1 // pred_fallthru
      _
    // Predicated region
    $region22: #{very_simple_model_forward.1} parent=1 // pred_check
      _
    $region23: #{very_simple_model_forward.1} parent=1 // pred_check_branch
      %47 = sbr.rel (0) target = $region25
    $region24: #{very_simple_model_forward.1} parent=1 // pred_region
      %49 = dma.done [#allocation6], 6144
    $region25: #{very_simple_model_forward.1} parent=1 // pred_fallthru
      _
    %v50 = vld [vmem:[%s0] sm:$0xff]
    %v51 = vld [vmem:[%s0 + $0x8] sm:$0xff]
    %v52 = vld [vmem:[#allocation2] sm:$0xff]
    %v53 = vld [vmem:[#allocation2 + $0x8] sm:$0xff]
    %v54 = vld [vmem:[#allocation2 + $0x10] sm:$0xff]
    %v55 = vld [vmem:[#allocation2 + $0x18] sm:$0xff]
    %v56 = vld [vmem:[#allocation2 + $0x20] sm:$0xff]
    %v57 = vld [vmem:[#allocation2 + $0x28] sm:$0xff]
    %v58 = vld [vmem:[#allocation2 + $0x30] sm:$0xff]
    %v59 = vld [vmem:[#allocation2 + $0x38] sm:$0xff]
    %v60 = vld [vmem:[#allocation2 + $0x40] sm:$0xff]
    %v61 = vld [vmem:[#allocation2 + $0x48] sm:$0xff]
    %v62 = vld [vmem:[#allocation2 + $0x50] sm:$0xff]
    %v63 = vld [vmem:[#allocation2 + $0x58] sm:$0xff]
    %v64 = vld [vmem:[#allocation2 + $0x60] sm:$0xff]
    %v65 = vld [vmem:[#allocation2 + $0x68] sm:$0xff]
    %v66 = vld [vmem:[#allocation2 + $0x70] sm:$0xff]
    %v67 = vld [vmem:[#allocation2 + $0x78] sm:$0xff]
    %v68 = vld [vmem:[#allocation2 + $0x80] sm:$0xff]
    %v69 = vld [vmem:[#allocation2 + $0x88] sm:$0xff]
    %v70 = vld [vmem:[#allocation2 + $0x90] sm:$0xff]
    %v71 = vld [vmem:[#allocation2 + $0x98] sm:$0xff]
    %v72 = vld [vmem:[#allocation2 + $0xa0] sm:$0xff]
    %v73 = vld [vmem:[#allocation2 + $0xa8] sm:$0xff]
    %v74 = vld [vmem:[#allocation2 + $0xb0] sm:$0xff]
    %v75 = vld [vmem:[#allocation2 + $0xb8] sm:$0xff]
    %v76 = vld [vmem:[#allocation2 + $0xc0] sm:$0xff]
    %v77 = vld [vmem:[#allocation2 + $0xc8] sm:$0xff]
    %v78 = vld [vmem:[#allocation2 + $0xd0] sm:$0xff]
    %v79 = vld [vmem:[#allocation2 + $0xd8] sm:$0xff]
    %v80 = vld [vmem:[#allocation2 + $0xe0] sm:$0xff]
    %v81 = vld [vmem:[#allocation2 + $0xe8] sm:$0xff]
    %v82 = vld [vmem:[#allocation2 + $0xf0] sm:$0xff]
    %v83 = vld [vmem:[#allocation2 + $0xf8] sm:$0xff]
    %v84 = vld [vmem:[#allocation2 + $0x100] sm:$0xff]
    %v85 = vld [vmem:[#allocation2 + $0x108] sm:$0xff]
    %v86 = vld [vmem:[#allocation2 + $0x110] sm:$0xff]
    %v87 = vld [vmem:[#allocation2 + $0x118] sm:$0xff]
    %v88 = vld [vmem:[#allocation2 + $0x120] sm:$0xff]
    %v89 = vld [vmem:[#allocation2 + $0x128] sm:$0xff]
    %v90 = vld [vmem:[#allocation2 + $0x130] sm:$0xff]
    %v91 = vld [vmem:[#allocation2 + $0x138] sm:$0xff]
    %v92 = vld [vmem:[#allocation2 + $0x140] sm:$0xff]
    %v93 = vld [vmem:[#allocation2 + $0x148] sm:$0xff]
    %v94 = vld [vmem:[#allocation2 + $0x150] sm:$0xff]
    %v95 = vld [vmem:[#allocation2 + $0x158] sm:$0xff]
    %v96 = vld [vmem:[#allocation2 + $0x160] sm:$0xff]
    %v97 = vld [vmem:[#allocation2 + $0x168] sm:$0xff]
    %v98 = vld [vmem:[#allocation2 + $0x170] sm:$0xff]
    %v99 = vld [vmem:[#allocation2 + $0x178] sm:$0xff]
    %v100 = vld [vmem:[#allocation2 + $0x180] sm:$0xff]
    %v101 = vld [vmem:[#allocation2 + $0x188] sm:$0xff]
    %v102 = vld [vmem:[#allocation2 + $0x190] sm:$0xff]
    %v103 = vld [vmem:[#allocation2 + $0x198] sm:$0xff]
    %v104 = vld [vmem:[#allocation2 + $0x1a0] sm:$0xff]
    %v105 = vld [vmem:[#allocation2 + $0x1a8] sm:$0xff]
    %v106 = vld [vmem:[#allocation2 + $0x1b0] sm:$0xff]
    %v107 = vld [vmem:[#allocation2 + $0x1b8] sm:$0xff]
    %v108 = vld [vmem:[#allocation2 + $0x1c0] sm:$0xff]
    %v109 = vld [vmem:[#allocation2 + $0x1c8] sm:$0xff]
    %v110 = vld [vmem:[#allocation2 + $0x1d0] sm:$0xff]
    %v111 = vld [vmem:[#allocation2 + $0x1d8] sm:$0xff]
    %v112 = vld [vmem:[#allocation2 + $0x1e0] sm:$0xff]
    %v113 = vld [vmem:[#allocation2 + $0x1e8] sm:$0xff]
    %v114 = vld [vmem:[#allocation2 + $0x1f0] sm:$0xff]
    %v115 = vld [vmem:[#allocation2 + $0x1f8] sm:$0xff]
    %v116 = vld [vmem:[#allocation2 + $0x200] sm:$0xff]
    %v117 = vld [vmem:[#allocation2 + $0x208] sm:$0xff]
    %v118 = vld [vmem:[#allocation2 + $0x210] sm:$0xff]
    %v119 = vld [vmem:[#allocation2 + $0x218] sm:$0xff]
    %v120 = vld [vmem:[#allocation2 + $0x220] sm:$0xff]
    %v121 = vld [vmem:[#allocation2 + $0x228] sm:$0xff]
    %v122 = vld [vmem:[#allocation2 + $0x230] sm:$0xff]
    %v123 = vld [vmem:[#allocation2 + $0x238] sm:$0xff]
    %v124 = vld [vmem:[#allocation2 + $0x240] sm:$0xff]
    %v125 = vld [vmem:[#allocation2 + $0x248] sm:$0xff]
    %v126 = vld [vmem:[#allocation2 + $0x250] sm:$0xff]
    %v127 = vld [vmem:[#allocation2 + $0x258] sm:$0xff]
    %v128 = vld [vmem:[#allocation2 + $0x260] sm:$0xff]
    %v129 = vld [vmem:[#allocation2 + $0x268] sm:$0xff]
    %v130 = vld [vmem:[#allocation2 + $0x270] sm:$0xff]
    %v131 = vld [vmem:[#allocation2 + $0x278] sm:$0xff]
    %v132 = vld [vmem:[#allocation2 + $0x280] sm:$0xff]
    %v133 = vld [vmem:[#allocation2 + $0x288] sm:$0xff]
    %v134 = vld [vmem:[#allocation2 + $0x290] sm:$0xff]
    %v135 = vld [vmem:[#allocation2 + $0x298] sm:$0xff]
    %v136 = vld [vmem:[#allocation2 + $0x2a0] sm:$0xff]
    %v137 = vld [vmem:[#allocation2 + $0x2a8] sm:$0xff]
    %v138 = vld [vmem:[#allocation2 + $0x2b0] sm:$0xff]
    %v139 = vld [vmem:[#allocation2 + $0x2b8] sm:$0xff]
    %v140 = vld [vmem:[#allocation2 + $0x2c0] sm:$0xff]
    %v141 = vld [vmem:[#allocation2 + $0x2c8] sm:$0xff]
    %v142 = vld [vmem:[#allocation2 + $0x2d0] sm:$0xff]
    %v143 = vld [vmem:[#allocation2 + $0x2d8] sm:$0xff]
    %v144 = vld [vmem:[#allocation2 + $0x2e0] sm:$0xff]
    %v145 = vld [vmem:[#allocation2 + $0x2e8] sm:$0xff]
    %v146 = vld [vmem:[#allocation2 + $0x2f0] sm:$0xff]
    %v147 = vld [vmem:[#allocation2 + $0x2f8] sm:$0xff]
    %v148 = vld [vmem:[#allocation2 + $0x300] sm:$0xff]
    %v149 = vld [vmem:[#allocation2 + $0x308] sm:$0xff]
    %v150 = vld [vmem:[#allocation2 + $0x310] sm:$0xff]
    %v151 = vld [vmem:[#allocation2 + $0x318] sm:$0xff]
    %v152 = vld [vmem:[#allocation2 + $0x320] sm:$0xff]
    %v153 = vld [vmem:[#allocation2 + $0x328] sm:$0xff]
    %v154 = vld [vmem:[#allocation2 + $0x330] sm:$0xff]
    %v155 = vld [vmem:[#allocation2 + $0x338] sm:$0xff]
    %v156 = vld [vmem:[#allocation2 + $0x340] sm:$0xff]
    %v157 = vld [vmem:[#allocation2 + $0x348] sm:$0xff]
    %v158 = vld [vmem:[#allocation2 + $0x350] sm:$0xff]
    %v159 = vld [vmem:[#allocation2 + $0x358] sm:$0xff]
    %v160 = vld [vmem:[#allocation2 + $0x360] sm:$0xff]
    %v161 = vld [vmem:[#allocation2 + $0x368] sm:$0xff]
    %v162 = vld [vmem:[#allocation2 + $0x370] sm:$0xff]
    %v163 = vld [vmem:[#allocation2 + $0x378] sm:$0xff]
    %v164 = vld [vmem:[#allocation2 + $0x380] sm:$0xff]
    %v165 = vld [vmem:[#allocation2 + $0x388] sm:$0xff]
    %v166 = vld [vmem:[#allocation2 + $0x390] sm:$0xff]
    %v167 = vld [vmem:[#allocation2 + $0x398] sm:$0xff]
    %v168 = vld [vmem:[#allocation2 + $0x3a0] sm:$0xff]
    %v169 = vld [vmem:[#allocation2 + $0x3a8] sm:$0xff]
    %v170 = vld [vmem:[#allocation2 + $0x3b0] sm:$0xff]
    %v171 = vld [vmem:[#allocation2 + $0x3b8] sm:$0xff]
    %v172 = vld [vmem:[#allocation2 + $0x3c0] sm:$0xff]
    %v173 = vld [vmem:[#allocation2 + $0x3c8] sm:$0xff]
    %v174 = vld [vmem:[#allocation2 + $0x3d0] sm:$0xff]
    %v175 = vld [vmem:[#allocation2 + $0x3d8] sm:$0xff]
    %v176 = vld [vmem:[#allocation2 + $0x3e0] sm:$0xff]
    %v177 = vld [vmem:[#allocation2 + $0x3e8] sm:$0xff]
    %v178 = vld [vmem:[#allocation2 + $0x3f0] sm:$0xff]
    %v179 = vld [vmem:[#allocation2 + $0x3f8] sm:$0xff]
    %v180 = vld [vmem:[%s3] sm:$0x1]
    %v182 = vperm.slane %v180, 0
    %186 = vst [vmem:[#allocation1] ss:$4 sm:$0xff] %v50
    %s187 = scalar_lea.vmem [#allocation1], 32
    %188 = vst [vmem:[%s187] ss:$4 sm:$0xff] %v51
    %v189 = vld.sshfl [vmem:[#allocation1] sm:$0xff pattern:$0x73625140]
    %v190 = vld.sshfl [vmem:[#allocation1 + $0x8] sm:$0xff pattern:$0x73625140]
    %v191 = vld.sshfl [vmem:[#allocation1 + $0x10] sm:$0xff pattern:$0x73625140]
    %v192 = vld.sshfl [vmem:[#allocation1 + $0x18] sm:$0xff pattern:$0x73625140]
    %v193 = vld.sshfl [vmem:[#allocation1 + $0x20] sm:$0xff pattern:$0x73625140]
    %v194 = vld.sshfl [vmem:[#allocation1 + $0x28] sm:$0xff pattern:$0x73625140]
    %v195 = vld.sshfl [vmem:[#allocation1 + $0x30] sm:$0xff pattern:$0x73625140]
    %v196 = vld.sshfl [vmem:[#allocation1 + $0x38] sm:$0xff pattern:$0x73625140]
    %205 = vmatpush.msra.mxu0 %v67
    %206 = vmatpush.msra.mxu0 %v66
    %207 = vmatpush.msra.mxu0 %v65
    %208 = vmatpush.msra.mxu0 %v64
    %209 = vmatpush.msra.mxu0 %v63
    %210 = vmatpush.msra.mxu0 %v62
    %211 = vmatpush.msra.mxu0 %v61
    %212 = vmatpush.msra.mxu0 %v60
    %213 = vmatpush.msra.mxu0 %v59
    %214 = vmatpush.msra.mxu0 %v58
    %215 = vmatpush.msra.mxu0 %v57
    %216 = vmatpush.msra.mxu0 %v56
    %217 = vmatpush.msra.mxu0 %v55
    %218 = vmatpush.msra.mxu0 %v54
    %219 = vmatpush.msra.mxu0 %v53
    %220 = vmatpush.msra.mxu0 %v52
    %221 = vmatmul.f32.gmra.mxu0 %v189
    %v222 = vpop.f32.mrf.mxu0
    %v223 = vadd.f32 %v182, %v222
    %224 = vdwg.mxu0
    %225 = vmatpush.msra.mxu0 %v83
    %226 = vmatpush.msra.mxu0 %v82
    %227 = vmatpush.msra.mxu0 %v81
    %228 = vmatpush.msra.mxu0 %v80
    %229 = vmatpush.msra.mxu0 %v79
    %230 = vmatpush.msra.mxu0 %v78
    %231 = vmatpush.msra.mxu0 %v77
    %232 = vmatpush.msra.mxu0 %v76
    %233 = vmatpush.msra.mxu0 %v75
    %234 = vmatpush.msra.mxu0 %v74
    %235 = vmatpush.msra.mxu0 %v73
    %236 = vmatpush.msra.mxu0 %v72
    %237 = vmatpush.msra.mxu0 %v71
    %238 = vmatpush.msra.mxu0 %v70
    %239 = vmatpush.msra.mxu0 %v69
    %240 = vmatpush.msra.mxu0 %v68
    %241 = vmatmul.f32.gmra.mxu0 %v190
    %v242 = vpop.f32.mrf.mxu0
    %v243 = vadd.f32 %v223, %v242
    %244 = vdwg.mxu0
    %245 = vmatpush.msra.mxu0 %v99
    %246 = vmatpush.msra.mxu0 %v98
    %247 = vmatpush.msra.mxu0 %v97
    %248 = vmatpush.msra.mxu0 %v96
    %249 = vmatpush.msra.mxu0 %v95
    %250 = vmatpush.msra.mxu0 %v94
    %251 = vmatpush.msra.mxu0 %v93
    %252 = vmatpush.msra.mxu0 %v92
    %253 = vmatpush.msra.mxu0 %v91
    %254 = vmatpush.msra.mxu0 %v90
    %255 = vmatpush.msra.mxu0 %v89
    %256 = vmatpush.msra.mxu0 %v88
    %257 = vmatpush.msra.mxu0 %v87
    %258 = vmatpush.msra.mxu0 %v86
    %259 = vmatpush.msra.mxu0 %v85
    %260 = vmatpush.msra.mxu0 %v84
    %261 = vmatmul.f32.gmra.mxu0 %v191
    %v262 = vpop.f32.mrf.mxu0
    %v263 = vadd.f32 %v243, %v262
    %264 = vdwg.mxu0
    %265 = vmatpush.msra.mxu0 %v115
    %266 = vmatpush.msra.mxu0 %v114
    %267 = vmatpush.msra.mxu0 %v113
    %268 = vmatpush.msra.mxu0 %v112
    %269 = vmatpush.msra.mxu0 %v111
    %270 = vmatpush.msra.mxu0 %v110
    %271 = vmatpush.msra.mxu0 %v109
    %272 = vmatpush.msra.mxu0 %v108
    %273 = vmatpush.msra.mxu0 %v107
    %274 = vmatpush.msra.mxu0 %v106
    %275 = vmatpush.msra.mxu0 %v105
    %276 = vmatpush.msra.mxu0 %v104
    %277 = vmatpush.msra.mxu0 %v103
    %278 = vmatpush.msra.mxu0 %v102
    %279 = vmatpush.msra.mxu0 %v101
    %280 = vmatpush.msra.mxu0 %v100
    %281 = vmatmul.f32.gmra.mxu0 %v192
    %v282 = vpop.f32.mrf.mxu0
    %v283 = vadd.f32 %v263, %v282
    %284 = vdwg.mxu0
    %285 = vmatpush.msra.mxu0 %v131
    %286 = vmatpush.msra.mxu0 %v130
    %287 = vmatpush.msra.mxu0 %v129
    %288 = vmatpush.msra.mxu0 %v128
    %289 = vmatpush.msra.mxu0 %v127
    %290 = vmatpush.msra.mxu0 %v126
    %291 = vmatpush.msra.mxu0 %v125
    %292 = vmatpush.msra.mxu0 %v124
    %293 = vmatpush.msra.mxu0 %v123
    %294 = vmatpush.msra.mxu0 %v122
    %295 = vmatpush.msra.mxu0 %v121
    %296 = vmatpush.msra.mxu0 %v120
    %297 = vmatpush.msra.mxu0 %v119
    %298 = vmatpush.msra.mxu0 %v118
    %299 = vmatpush.msra.mxu0 %v117
    %300 = vmatpush.msra.mxu0 %v116
    %301 = vmatmul.f32.gmra.mxu0 %v193
    %v302 = vpop.f32.mrf.mxu0
    %v303 = vadd.f32 %v283, %v302
    %304 = vdwg.mxu0
    %305 = vmatpush.msra.mxu0 %v147
    %306 = vmatpush.msra.mxu0 %v146
    %307 = vmatpush.msra.mxu0 %v145
    %308 = vmatpush.msra.mxu0 %v144
    %309 = vmatpush.msra.mxu0 %v143
    %310 = vmatpush.msra.mxu0 %v142
    %311 = vmatpush.msra.mxu0 %v141
    %312 = vmatpush.msra.mxu0 %v140
    %313 = vmatpush.msra.mxu0 %v139
    %314 = vmatpush.msra.mxu0 %v138
    %315 = vmatpush.msra.mxu0 %v137
    %316 = vmatpush.msra.mxu0 %v136
    %317 = vmatpush.msra.mxu0 %v135
    %318 = vmatpush.msra.mxu0 %v134
    %319 = vmatpush.msra.mxu0 %v133
    %320 = vmatpush.msra.mxu0 %v132
    %321 = vmatmul.f32.gmra.mxu0 %v194
    %v322 = vpop.f32.mrf.mxu0
    %v323 = vadd.f32 %v303, %v322
    %324 = vdwg.mxu0
    %325 = vmatpush.msra.mxu0 %v163
    %326 = vmatpush.msra.mxu0 %v162
    %327 = vmatpush.msra.mxu0 %v161
    %328 = vmatpush.msra.mxu0 %v160
    %329 = vmatpush.msra.mxu0 %v159
    %330 = vmatpush.msra.mxu0 %v158
    %331 = vmatpush.msra.mxu0 %v157
    %332 = vmatpush.msra.mxu0 %v156
    %333 = vmatpush.msra.mxu0 %v155
    %334 = vmatpush.msra.mxu0 %v154
    %335 = vmatpush.msra.mxu0 %v153
    %336 = vmatpush.msra.mxu0 %v152
    %337 = vmatpush.msra.mxu0 %v151
    %338 = vmatpush.msra.mxu0 %v150
    %339 = vmatpush.msra.mxu0 %v149
    %340 = vmatpush.msra.mxu0 %v148
    %341 = vmatmul.f32.gmra.mxu0 %v195
    %v342 = vpop.f32.mrf.mxu0
    %v343 = vadd.f32 %v323, %v342
    %344 = vdwg.mxu0
    %345 = vmatpush.msra.mxu0 %v179
    %346 = vmatpush.msra.mxu0 %v178
    %347 = vmatpush.msra.mxu0 %v177
    %348 = vmatpush.msra.mxu0 %v176
    %349 = vmatpush.msra.mxu0 %v175
    %350 = vmatpush.msra.mxu0 %v174
    %351 = vmatpush.msra.mxu0 %v173
    %352 = vmatpush.msra.mxu0 %v172
    %353 = vmatpush.msra.mxu0 %v171
    %354 = vmatpush.msra.mxu0 %v170
    %355 = vmatpush.msra.mxu0 %v169
    %356 = vmatpush.msra.mxu0 %v168
    %357 = vmatpush.msra.mxu0 %v167
    %358 = vmatpush.msra.mxu0 %v166
    %359 = vmatpush.msra.mxu0 %v165
    %360 = vmatpush.msra.mxu0 %v164
    %361 = vmatmul.f32.gmra.mxu0 %v196
    %v362 = vpop.f32.mrf.mxu0
    %v363 = vadd.f32 %v343, %v362
    %364 = vdwg.mxu0
    %v365 = vmax.f32 %v363, 0.0
    %v366 = vld [vmem:[#allocation5] sm:$0xff]
    %v367 = vld [vmem:[#allocation5 + $0x8] sm:$0xff]
    %v368 = vld [vmem:[#allocation5 + $0x10] sm:$0xff]
    %v369 = vld [vmem:[#allocation5 + $0x18] sm:$0xff]
    %v370 = vld [vmem:[#allocation5 + $0x20] sm:$0xff]
    %v371 = vld [vmem:[#allocation5 + $0x28] sm:$0xff]
    %v372 = vld [vmem:[#allocation5 + $0x30] sm:$0xff]
    %v373 = vld [vmem:[#allocation5 + $0x38] sm:$0xff]
    %v374 = vld [vmem:[#allocation5 + $0x40] sm:$0xff]
    %v375 = vld [vmem:[#allocation5 + $0x48] sm:$0xff]
    %v376 = vld [vmem:[#allocation5 + $0x50] sm:$0xff]
    %v377 = vld [vmem:[#allocation5 + $0x58] sm:$0xff]
    %v378 = vld [vmem:[#allocation5 + $0x60] sm:$0xff]
    %v379 = vld [vmem:[#allocation5 + $0x68] sm:$0xff]
    %v380 = vld [vmem:[#allocation5 + $0x70] sm:$0xff]
    %v381 = vld [vmem:[#allocation5 + $0x78] sm:$0xff]
    %s382 = scalar_lea.vmem %s3, 1
    %v383 = vld [vmem:[%s382] sm:$0x1]
    %v385 = vperm.slane %v383, 0
    %387 = vmatpush.msra.mxu0 %v381
    %388 = vmatpush.msra.mxu0 %v380
    %389 = vmatpush.msra.mxu0 %v379
    %390 = vmatpush.msra.mxu0 %v378
    %391 = vmatpush.msra.mxu0 %v377
    %392 = vmatpush.msra.mxu0 %v376
    %393 = vmatpush.msra.mxu0 %v375
    %394 = vmatpush.msra.mxu0 %v374
    %395 = vmatpush.msra.mxu0 %v373
    %396 = vmatpush.msra.mxu0 %v372
    %397 = vmatpush.msra.mxu0 %v371
    %398 = vmatpush.msra.mxu0 %v370
    %399 = vmatpush.msra.mxu0 %v369
    %400 = vmatpush.msra.mxu0 %v368
    %401 = vmatpush.msra.mxu0 %v367
    %402 = vmatpush.msra.mxu0 %v366
    %403 = vmatmul.f32.gmra.mxu0 %v365
    %v404 = vpop.f32.mrf.mxu0
    %v405 = vadd.f32 %v385, %v404
    %406 = vdwg.mxu0
    %v407 = vmax.f32 %v405, 0.0
    %s408 = scalar_lea.vmem [#allocation5], 128
    %v409 = vld [vmem:[%s408] sm:$0xff]
    %v410 = vld [vmem:[%s408 + $0x8] sm:$0xff]
    %v411 = vld [vmem:[%s408 + $0x10] sm:$0xff]
    %v412 = vld [vmem:[%s408 + $0x18] sm:$0xff]
    %v413 = vld [vmem:[%s408 + $0x20] sm:$0xff]
    %v414 = vld [vmem:[%s408 + $0x28] sm:$0xff]
    %v415 = vld [vmem:[%s408 + $0x30] sm:$0xff]
    %v416 = vld [vmem:[%s408 + $0x38] sm:$0xff]
    %v417 = vld [vmem:[%s408 + $0x40] sm:$0xff]
    %v418 = vld [vmem:[%s408 + $0x48] sm:$0xff]
    %v419 = vld [vmem:[%s408 + $0x50] sm:$0xff]
    %v420 = vld [vmem:[%s408 + $0x58] sm:$0xff]
    %v421 = vld [vmem:[%s408 + $0x60] sm:$0xff]
    %v422 = vld [vmem:[%s408 + $0x68] sm:$0xff]
    %v423 = vld [vmem:[%s408 + $0x70] sm:$0xff]
    %v424 = vld [vmem:[%s408 + $0x78] sm:$0xff]
    %s425 = scalar_lea.vmem %s3, 2
    %v426 = vld [vmem:[%s425] sm:$0x1]
    %v428 = vperm.slane %v426, 0
    %430 = vmatpush.msra.mxu0 %v424
    %431 = vmatpush.msra.mxu0 %v423
    %432 = vmatpush.msra.mxu0 %v422
    %433 = vmatpush.msra.mxu0 %v421
    %434 = vmatpush.msra.mxu0 %v420
    %435 = vmatpush.msra.mxu0 %v419
    %436 = vmatpush.msra.mxu0 %v418
    %437 = vmatpush.msra.mxu0 %v417
    %438 = vmatpush.msra.mxu0 %v416
    %439 = vmatpush.msra.mxu0 %v415
    %440 = vmatpush.msra.mxu0 %v414
    %441 = vmatpush.msra.mxu0 %v413
    %442 = vmatpush.msra.mxu0 %v412
    %443 = vmatpush.msra.mxu0 %v411
    %444 = vmatpush.msra.mxu0 %v410
    %445 = vmatpush.msra.mxu0 %v409
    %446 = vmatmul.f32.gmra.mxu0 %v407
    %v447 = vpop.f32.mrf.mxu0
    %v448 = vadd.f32 %v428, %v447
    %449 = vdwg.mxu0
    %v450 = vmax.f32 %v448, 0.0
    %s451 = scalar_lea.vmem [#allocation5], 256
    %v452 = vld [vmem:[%s451] sm:$0xff]
    %v453 = vld [vmem:[%s451 + $0x8] sm:$0xff]
    %v454 = vld [vmem:[%s451 + $0x10] sm:$0xff]
    %v455 = vld [vmem:[%s451 + $0x18] sm:$0xff]
    %v456 = vld [vmem:[%s451 + $0x20] sm:$0xff]
    %v457 = vld [vmem:[%s451 + $0x28] sm:$0xff]
    %v458 = vld [vmem:[%s451 + $0x30] sm:$0xff]
    %v459 = vld [vmem:[%s451 + $0x38] sm:$0xff]
    %v460 = vld [vmem:[%s451 + $0x40] sm:$0xff]
    %v461 = vld [vmem:[%s451 + $0x48] sm:$0xff]
    %v462 = vld [vmem:[%s451 + $0x50] sm:$0xff]
    %v463 = vld [vmem:[%s451 + $0x58] sm:$0xff]
    %v464 = vld [vmem:[%s451 + $0x60] sm:$0xff]
    %v465 = vld [vmem:[%s451 + $0x68] sm:$0xff]
    %v466 = vld [vmem:[%s451 + $0x70] sm:$0xff]
    %v467 = vld [vmem:[%s451 + $0x78] sm:$0xff]
    %s468 = scalar_lea.vmem %s3, 3
    %v469 = vld [vmem:[%s468] sm:$0x1]
    %v471 = vperm.slane %v469, 0
    %473 = vmatpush.msra.mxu0 %v467
    %474 = vmatpush.msra.mxu0 %v466
    %475 = vmatpush.msra.mxu0 %v465
    %476 = vmatpush.msra.mxu0 %v464
    %477 = vmatpush.msra.mxu0 %v463
    %478 = vmatpush.msra.mxu0 %v462
    %479 = vmatpush.msra.mxu0 %v461
    %480 = vmatpush.msra.mxu0 %v460
    %481 = vmatpush.msra.mxu0 %v459
    %482 = vmatpush.msra.mxu0 %v458
    %483 = vmatpush.msra.mxu0 %v457
    %484 = vmatpush.msra.mxu0 %v456
    %485 = vmatpush.msra.mxu0 %v455
    %486 = vmatpush.msra.mxu0 %v454
    %487 = vmatpush.msra.mxu0 %v453
    %488 = vmatpush.msra.mxu0 %v452
    %489 = vmatmul.f32.gmra.mxu0 %v450
    %v490 = vpop.f32.mrf.mxu0
    %v491 = vadd.f32 %v471, %v490
    %492 = vdwg.mxu0
    %493 = vst [vmem:[#allocation7] sm:$0x3] %v491
    // Predicated region
    $region26: #{very_simple_model_forward.1} parent=1 // pred_check
      _
    $region27: #{very_simple_model_forward.1} parent=1 // pred_check_branch
      %495 = sbr.rel (0) target = $region29
    $region28: #{very_simple_model_forward.1} parent=1 // pred_region
      %497 = vsyncadd [#allocation4], 0
      %s499 = sshll.u32 [#allocation7], 4
      %s500 = int_to_ptr.vmem [resolvable:$true] %s499
      %s501 = sshll.u32 %s4, 4
      %s502 = int_to_ptr.hbm [resolvable:$true] %s501
      %504 = dma.vmem_to_hbm [thread:$0]  %s500, 32, %s502, [#allocation4]
    $region29: #{very_simple_model_forward.1} parent=1 // pred_fallthru
      _
    // Predicated region
    $region30: #{very_simple_model_forward.1} parent=1 // pred_check
      _
    $region31: #{very_simple_model_forward.1} parent=1 // pred_check_branch
      %506 = sbr.rel (0) target = $region33
    $region32: #{very_simple_model_forward.1} parent=1 // pred_region
      %508 = dma.done [#allocation4], 32
    $region33: #{very_simple_model_forward.1} parent=1 // pred_fallthru
      _
    %509 = vsyncpa [#allocation3], 1
    %510 = vsyncpa [#allocation6], 1
    %511 = vsyncpa [#allocation4], 1

</llo_original>
